<compile_context>
chip_gen: v7x
topology: tpu7x:2x2x1
jax: 0.10.0
libtpu: 0.0.40
codegen_flags: <defaults>
</compile_context>

<pallas_src>
import functools
import math

import jax
import jax.numpy as jnp
from jax.experimental import pallas as pl
from jax.experimental.pallas import tpu as pltpu

_SQRT1_2 = 0.7071067811865476


def _gelu(h, approximate):
    if approximate:
        # tanh approximation -> EUP slot (cheap); slight deviation from torch default.
        return jax.nn.gelu(h, approximate=True)
    # Exact erf form, matching torch.nn.GELU() default numerics.
    return 0.5 * h * (1.0 + jax.lax.erf(h * _SQRT1_2))


# ----------------------------------------------------------------------------
# Kernels
# ----------------------------------------------------------------------------
def ffn_resident_kernel(x_ref, w1_ref, b1_ref, w2_ref, b2_ref, o_ref, *, approx_gelu):
    """Weights fully VMEM-resident: one-shot FFN, no reduction axis, no scratch.

    x_ref : (C, tm)      w1_ref: (C4, C)   b1_ref: (C4, 1)
    w2_ref: (C, C4)      b2_ref: (C, 1)    o_ref : (C, tm)
    """
    x = x_ref[...]                                            # native dtype
    # fc1: (C4, C) @ (C, tm) -> (C4, tm) on the MXU, f32 accumulation.
    h = jnp.dot(w1_ref[...], x, preferred_element_type=jnp.float32)
    h = h + b1_ref[...].astype(jnp.float32)
    h = _gelu(h, approx_gelu)
    # Dropout (eval mode) -> identity.
    # fc2: (C, C4) @ (C4, tm) -> (C, tm); fold bias + residual, single store.
    out = jnp.dot(w2_ref[...], h.astype(w2_ref.dtype),
                  preferred_element_type=jnp.float32)
    out = out + b2_ref[...].astype(jnp.float32) + x.astype(jnp.float32)
    o_ref[...] = out.astype(o_ref.dtype)                      # lane-dense store


def ffn_chunked_kernel(x_ref, w1_ref, b1_ref, w2_ref, b2_ref, o_ref, acc_ref, *,
                       approx_gelu):
    """Fallback for large 4*hidden: stream weight chunks along reduction axis k.

    x_ref : (C, tm)      w1_ref: (tk, C)   b1_ref: (tk, 1)
    w2_ref: (C, tk)      b2_ref: (C, 1)    o_ref : (C, tm)   acc_ref: (C, tm) f32
    """
    k = pl.program_id(2)
    x = x_ref[...]

    h = jnp.dot(w1_ref[...], x, preferred_element_type=jnp.float32)
    h = h + b1_ref[...].astype(jnp.float32)
    h = _gelu(h, approx_gelu)
    part = jnp.dot(w2_ref[...], h.astype(w2_ref.dtype),
                   preferred_element_type=jnp.float32)

    @pl.when(k == 0)
    def _():
        # Fold fc2 bias + residual into the FIRST partial (no separate init pass).
        acc_ref[...] = part + x.astype(jnp.float32) + b2_ref[...].astype(jnp.float32)

    @pl.when(k > 0)
    def _():
        acc_ref[...] += part

    @pl.when(k == pl.num_programs(2) - 1)
    def _():
        o_ref[...] = acc_ref[...].astype(o_ref.dtype)


# ----------------------------------------------------------------------------
# Wrapper
# ----------------------------------------------------------------------------
def _vmem_capacity_bytes():
    try:
        info = pltpu.get_tpu_info()
        cap = getattr(info, "vmem_capacity_bytes", None)
        if cap:
            return int(cap)
    except Exception:
        pass
    return 64 * 1024 * 1024   # conservative: v7x per-TensorCore VMEM


def feed_forward_pallas(x_nchw, w1, b1, w2, b2, *, tm=None, tk=None,
                        approx_gelu=False, compute_dtype=None):
    """FeedForward forward pass (eval-mode dropout).

    x_nchw: (N, C, H, W)  PyTorch NCHW layout, C == hidden_dim == input_dim
    w1    : (4*hidden, C) PyTorch Conv2d weight layout (1x1 kernel squeezed)
    b1    : (4*hidden,)
    w2    : (C, 4*hidden)
    b2    : (C,)
    compute_dtype: optional (e.g. jnp.bfloat16) matmul-operand dtype; output
                   stays in x's dtype, accumulation stays f32.
    """
    N, C, H, W = x_nchw.shape
    C4 = w1.shape[0]
    assert w1.shape == (C4, C) and w2.shape == (C, C4)
    assert b1.shape == (C4,) and b2.shape == (C,)

    out_dtype = x_nchw.dtype
    cdt = jnp.dtype(compute_dtype) if compute_dtype is not None else jnp.dtype(out_dtype)
    c_item = cdt.itemsize
    o_item = jnp.dtype(out_dtype).itemsize

    # Sublane tiling requirement depends on the packed dtype (f32:8, bf16:16, i8:32).
    sublane = max(8, 32 // c_item)
    assert C % sublane == 0, "channel count must be a multiple of the sublane tile"
    assert C4 % sublane == 0, "4*hidden must be a multiple of the sublane tile"

    HW = H * W

    # --- pixel tile: as large as reasonable (fewer, fatter grid steps) --------
    if tm is None:
        tm = HW if HW <= 2048 else 1024
    tm = min(tm, HW)
    assert HW % tm == 0, "H*W must be divisible by the pixel tile size"
    # Expose >= 2 steps on the parallel axes so both v7x TensorCores get work.
    while N * (HW // tm) < 2 and tm % 2 == 0 and (tm // 2) % 128 == 0:
        tm //= 2
    assert tm % 128 == 0 or tm == HW, "pixel tile should be lane-aligned"

    # --- VMEM footprint model (bytes), incl. lane-padded (·,1) bias blocks ----
    def footprint(tk_, chunked):
        fp = 0
        fp += 2 * C * tm * c_item            # x tile (double-buffered)
        fp += 2 * C * tm * o_item            # out tile
        fp += 2 * tk_ * C * c_item           # w1 (chunk)
        fp += 2 * C * tk_ * c_item           # w2 (chunk)
        fp += 2 * tk_ * 128 * 4              # b1: (tk,1) lane-padded to 128
        fp += 2 * C * 128 * 4                # b2: (C,1) lane-padded to 128
        fp += tk_ * tm * 4                   # h intermediate (f32)
        fp += 2 * C * tm * 4                 # f32 temps (residual / out)
        if chunked:
            fp += C * tm * 4                 # accumulator scratch
        return fp

    cap = _vmem_capacity_bytes()
    budget = int(cap * 0.60)                 # leave headroom for Mosaic scratch

    if tk is None:
        if footprint(C4, chunked=False) <= budget:
            tk = C4                          # weights-resident fast path
        else:
            candidates = [t for t in (C4, 4096, 2048, 1024, 512, 256, 128)
                          if t <= C4 and C4 % t == 0 and (t % 128 == 0 or t == C4)]
            tk = candidates[-1]
            for t in candidates:
                if footprint(t, chunked=True) <= budget:
                    tk = t
                    break
    tk = min(tk, C4)
    assert C4 % tk == 0

    resident = (tk == C4) and footprint(C4, chunked=False) <= budget
    fp = footprint(tk, chunked=not resident)
    vmem_limit = int(min(max(2 * fp, 32 * 1024 * 1024), cap * 0.75))

    # --- operands (NCHW -> (N*C, H*W): pure reshape, no transpose) ------------
    x2d = x_nchw.reshape(N * C, HW).astype(cdt)
    w1c = w1.astype(cdt)
    w2c = w2.astype(cdt)
    b1_2d = b1.reshape(C4, 1)
    b2_2d = b2.reshape(C, 1)

    cost = pl.CostEstimate(
        flops=2 * 2 * N * HW * C * C4,                       # fc1 + fc2 matmuls
        transcendentals=N * HW * C4,                         # GELU erf/tanh
        bytes_accessed=(x2d.size * c_item + w1c.size * c_item + w2c.size * c_item
                        + b1.size * 4 + b2.size * 4 + N * C * HW * o_item),
    )

    if resident:
        kernel = functools.partial(ffn_resident_kernel, approx_gelu=approx_gelu)
        grid_spec = pltpu.PrefetchScalarGridSpec(
            num_scalar_prefetch=0,
            grid=(N, HW // tm),
            in_specs=[
                pl.BlockSpec((C, tm), lambda n, i: (n, i)),    # x tile
                pl.BlockSpec((C4, C), lambda n, i: (0, 0)),    # w1 (resident)
                pl.BlockSpec((C4, 1), lambda n, i: (0, 0)),    # b1 (resident)
                pl.BlockSpec((C, C4), lambda n, i: (0, 0)),    # w2 (resident)
                pl.BlockSpec((C, 1),  lambda n, i: (0, 0)),    # b2 (resident)
            ],
            out_specs=pl.BlockSpec((C, tm), lambda n, i: (n, i)),
        )
        dim_sem = ("parallel", "parallel")
    else:
        kernel = functools.partial(ffn_chunked_kernel, approx_gelu=approx_gelu)
        grid_spec = pltpu.PrefetchScalarGridSpec(
            num_scalar_prefetch=0,
            grid=(N, HW // tm, C4 // tk),                      # reduction innermost
            in_specs=[
                pl.BlockSpec((C, tm), lambda n, i, k: (n, i)),  # x (revisited over k)
                pl.BlockSpec((tk, C), lambda n, i, k: (k, 0)),  # w1 chunk
                pl.BlockSpec((tk, 1), lambda n, i, k: (k, 0)),  # b1 chunk
                pl.BlockSpec((C, tk), lambda n, i, k: (0, k)),  # w2 chunk
                pl.BlockSpec((C, 1),  lambda n, i, k: (0, 0)),  # b2 (constant)
            ],
            out_specs=pl.BlockSpec((C, tm), lambda n, i, k: (n, i)),
            scratch_shapes=[pltpu.VMEM((C, tm), jnp.float32)],  # f32 accumulator
        )
        dim_sem = ("parallel", "parallel", "arbitrary")

    out2d = pl.pallas_call(
        kernel,
        out_shape=jax.ShapeDtypeStruct((N * C, HW), out_dtype),
        grid_spec=grid_spec,
        compiler_params=pltpu.CompilerParams(
            dimension_semantics=dim_sem,
            vmem_limit_bytes=vmem_limit,
        ),
        cost_estimate=cost,
    )(x2d, w1c, b1_2d, w2c, b2_2d)

    # (N*C, H*W) -> NCHW: free reshape.
    return out2d.reshape(N, C, H, W)


# ----------------------------------------------------------------------------
# Reference / init / demo
# ----------------------------------------------------------------------------
def init_params(key, input_dim, hidden_dim, dtype=jnp.float32):
    """Deterministic init mimicking PyTorch Conv2d defaults (kaiming-uniform-ish).

    Weights are stored in PyTorch conv layout (out_channels, in_channels)."""
    c4 = 4 * hidden_dim
    k1, k2, k3, k4 = jax.random.split(key, 4)
    bound1 = 1.0 / math.sqrt(input_dim)   # fan_in of 1x1 conv = in_channels
    bound2 = 1.0 / math.sqrt(c4)
    w1 = jax.random.uniform(k1, (c4, input_dim), dtype, -bound1, bound1)
    b1 = jax.random.uniform(k2, (c4,), dtype, -bound1, bound1)
    w2 = jax.random.uniform(k3, (hidden_dim, c4), dtype, -bound2, bound2)
    b2 = jax.random.uniform(k4, (hidden_dim,), dtype, -bound2, bound2)
    return w1, b1, w2, b2


def feed_forward_ref(x_nchw, w1, b1, w2, b2):
    """Pure-JAX reference (eval mode), NCHW in / NCHW out."""
    N, C, H, W = x_nchw.shape
    xm = x_nchw.reshape(N, C, H * W).astype(jnp.float32)
    h = jnp.einsum("oc,ncm->nom", w1.astype(jnp.float32), xm)
    h = h + b1.astype(jnp.float32)[None, :, None]
    h = 0.5 * h * (1.0 + jax.lax.erf(h * _SQRT1_2))
    o = jnp.einsum("co,nom->ncm", w2.astype(jnp.float32), h)
    o = o + b2.astype(jnp.float32)[None, :, None]
    o = o + xm
    return o.reshape(N, C, H, W).astype(x_nchw.dtype)


if __name__ == "__main__":
    # Residual `hidden + input_data` requires hidden_dim == input_dim.
    input_dim = hidden_dim = 32
    N, H, W = 2, 16, 32                     # H*W = 512 pixels per sample (lane-dense)

    key = jax.random.PRNGKey(0)
    kx, kp = jax.random.split(key)
    x = jax.random.normal(kx, (N, input_dim, H, W), jnp.float32)   # NCHW, like PyTorch
    w1, b1, w2, b2 = init_params(kp, input_dim, hidden_dim)

    out = feed_forward_pallas(x, w1, b1, w2, b2)
    out = jax.block_until_ready(out)

    ref = feed_forward_ref(x, w1, b1, w2, b2)
    assert out.shape == x.shape
    assert jnp.allclose(out, ref, atol=1e-4, rtol=1e-4), float(jnp.max(jnp.abs(out - ref)))

    print("KERNEL_OK")
</pallas_src>

<mosaic_0001>
module attributes {stable_mosaic.version = 11 : i64} {
  func.func @ffn_resident_kernel(%arg0: i32, %arg1: i32, %arg2: memref<32x512xf32, #tpu.memory_space<vmem>>, %arg3: memref<128x32xf32, #tpu.memory_space<vmem>>, %arg4: memref<128x1xf32, #tpu.memory_space<vmem>>, %arg5: memref<32x128xf32, #tpu.memory_space<vmem>>, %arg6: memref<32x1xf32, #tpu.memory_space<vmem>>, %arg7: memref<32x512xf32, #tpu.memory_space<vmem>>) attributes {dimension_semantics = [#tpu.dimension_semantics<parallel>, #tpu.dimension_semantics<parallel>], iteration_bounds = array<i64: 2, 1>, scalar_prefetch = 0 : i64, scratch_operands = 0 : i64, tpu.core_type = #tpu.core_type<tc>, window_params = [{transform_indices = @transform_0, window_bounds = array<i64: 32, 512>}, {pipeline_mode = #tpu.pipeline_mode<synchronous>, transform_indices = @transform_1, window_bounds = array<i64: 128, 32>}, {pipeline_mode = #tpu.pipeline_mode<synchronous>, transform_indices = @transform_2, window_bounds = array<i64: 128, 1>}, {pipeline_mode = #tpu.pipeline_mode<synchronous>, transform_indices = @transform_3, window_bounds = array<i64: 32, 128>}, {pipeline_mode = #tpu.pipeline_mode<synchronous>, transform_indices = @transform_4, window_bounds = array<i64: 32, 1>}, {transform_indices = @transform_5, window_bounds = array<i64: 32, 512>}]} {
    %c0 = arith.constant 0 : index
    %c0_0 = arith.constant 0 : index
    %0 = vector.load %arg2[%c0, %c0_0] : memref<32x512xf32, #tpu.memory_space<vmem>>, vector<32x512xf32>
    %c0_1 = arith.constant 0 : index
    %c0_2 = arith.constant 0 : index
    %1 = vector.load %arg3[%c0_1, %c0_2] : memref<128x32xf32, #tpu.memory_space<vmem>>, vector<128x32xf32>
    %cst = arith.constant dense<0.000000e+00> : vector<128x512xf32>
    %2 = tpu.matmul %1, %0, %cst {dimension_numbers = #tpu.dot_dimension_numbers<[1], [0], [0], [1], [0, 0, 1, 1], [], []>} : vector<128x32xf32>, vector<32x512xf32>, vector<128x512xf32> -> vector<128x512xf32>
    %c0_3 = arith.constant 0 : index
    %c0_4 = arith.constant 0 : index
    %3 = vector.load %arg4[%c0_3, %c0_4] : memref<128x1xf32, #tpu.memory_space<vmem>>, vector<128x1xf32>
    %4 = vector.broadcast %3 : vector<128x1xf32> to vector<128x512xf32>
    %5 = arith.addf %2, %4 : vector<128x512xf32>
    %cst_5 = arith.constant 5.000000e-01 : f32
    %6 = vector.broadcast %cst_5 : f32 to vector<128x512xf32>
    %7 = arith.mulf %6, %5 : vector<128x512xf32>
    %cst_6 = arith.constant 0.707106769 : f32
    %8 = vector.broadcast %cst_6 : f32 to vector<128x512xf32>
    %9 = arith.mulf %5, %8 : vector<128x512xf32>
    %10 = math.erf %9 : vector<128x512xf32>
    %cst_7 = arith.constant 1.000000e+00 : f32
    %11 = vector.broadcast %cst_7 : f32 to vector<128x512xf32>
    %12 = arith.addf %11, %10 : vector<128x512xf32>
    %13 = arith.mulf %7, %12 : vector<128x512xf32>
    %c0_8 = arith.constant 0 : index
    %c0_9 = arith.constant 0 : index
    %14 = vector.load %arg5[%c0_8, %c0_9] : memref<32x128xf32, #tpu.memory_space<vmem>>, vector<32x128xf32>
    %cst_10 = arith.constant dense<0.000000e+00> : vector<32x512xf32>
    %15 = tpu.matmul %14, %13, %cst_10 {dimension_numbers = #tpu.dot_dimension_numbers<[1], [0], [0], [1], [0, 0, 1, 1], [], []>} : vector<32x128xf32>, vector<128x512xf32>, vector<32x512xf32> -> vector<32x512xf32>
    %c0_11 = arith.constant 0 : index
    %c0_12 = arith.constant 0 : index
    %16 = vector.load %arg6[%c0_11, %c0_12] : memref<32x1xf32, #tpu.memory_space<vmem>>, vector<32x1xf32>
    %17 = vector.broadcast %16 : vector<32x1xf32> to vector<32x512xf32>
    %18 = arith.addf %15, %17 : vector<32x512xf32>
    %19 = arith.addf %18, %0 : vector<32x512xf32>
    %c0_13 = arith.constant 0 : index
    %c0_14 = arith.constant 0 : index
    %20 = vector.load %arg7[%c0_13, %c0_14] : memref<32x512xf32, #tpu.memory_space<vmem>>, vector<32x512xf32>
    tpu.vector_store %arg7[%c0_13, %c0_14], %19 {strides = array<i32>} : memref<32x512xf32, #tpu.memory_space<vmem>>, vector<32x512xf32>,
    return
  }
  func.func @transform_0(%arg0: i32, %arg1: i32) -> (i32, i32) {
    %c0_i32 = arith.constant 0 : i32
    return %arg0, %arg1 : i32, i32
  }
  func.func @transform_1(%arg0: i32, %arg1: i32) -> (i32, i32) {
    %c0_i32 = arith.constant 0 : i32
    %c0_i32_0 = arith.constant 0 : i32
    %c0_i32_1 = arith.constant 0 : i32
    return %c0_i32, %c0_i32_0 : i32, i32
  }
  func.func @transform_2(%arg0: i32, %arg1: i32) -> (i32, i32) {
    %c0_i32 = arith.constant 0 : i32
    %c0_i32_0 = arith.constant 0 : i32
    %c0_i32_1 = arith.constant 0 : i32
    return %c0_i32, %c0_i32_0 : i32, i32
  }
  func.func @transform_3(%arg0: i32, %arg1: i32) -> (i32, i32) {
    %c0_i32 = arith.constant 0 : i32
    %c0_i32_0 = arith.constant 0 : i32
    %c0_i32_1 = arith.constant 0 : i32
    return %c0_i32, %c0_i32_0 : i32, i32
  }
  func.func @transform_4(%arg0: i32, %arg1: i32) -> (i32, i32) {
    %c0_i32 = arith.constant 0 : i32
    %c0_i32_0 = arith.constant 0 : i32
    %c0_i32_1 = arith.constant 0 : i32
    return %c0_i32, %c0_i32_0 : i32, i32
  }
  func.func @transform_5(%arg0: i32, %arg1: i32) -> (i32, i32) {
    %c0_i32 = arith.constant 0 : i32
    return %arg0, %arg1 : i32, i32
  }
}

</mosaic_0001>

<llo_original>
// kernel: tpu_custom_call.1
$region0: #{tpu_custom_call.1}
  #allocation0 [shape = 'u32[]', space=smem, size = 0x4, offset = 0x4, fixed_abs, tag = 'smem constant byte address 0x4 - core index']
  #allocation1 [shape = 'u32[144,128]{1,0:T(1,128)}', space=vmem, size = 0x12000, scoped, tag = 'internal scratch']
  %s0 = inlined_call_operand.vmem [shape: f32[64,512], index: 0, kind: input, shape index: {}]
  %s1 = inlined_call_operand.vmem [shape: f32[128,32], index: 1, kind: input, shape index: {}]
  %s2 = inlined_call_operand.vmem [shape: f32[128,1], index: 2, kind: input, shape index: {}]
  %s3 = inlined_call_operand.vmem [shape: f32[32,128], index: 3, kind: input, shape index: {}]
  %s4 = inlined_call_operand.vmem [shape: f32[32,1], index: 4, kind: input, shape index: {}]
  %s5 = inlined_call_operand.hbm [shape: f32[64,512], index: 5, kind: output, shape index: {}]
  %s6 = sld [smem:[#allocation0]]
  $region53: #{tpu_custom_call.1} parent=0
    _
  %s8 = ssub.s32 1, %s6
  %s9 = scalar_select 0, %s8, %s6
  $region1: #{tpu_custom_call.1} parent=0
    #allocation2 [shape = 'u8[131072]{0}', space=vmem, size = 0x20000, scoped, tag = 'output window, operand 0']
    #allocation3 [shape = 's32[2]{0}', space=sflag, size = 0x8, scoped, tag = 'scoped memory for tpu_custom_call.1']
    %10 = vsyncpa [#allocation3], 0
    %s11 = scalar_lea.sflag [#allocation3], 1
    %12 = vsyncpa %s11, 0
    loop: start=0, step=1, limit=4
    $region2: #{tpu_custom_call.1} parent=1 // loop_pre_header
      _
    $region3: #{tpu_custom_call.1} parent=1 // loop_header
      %s14 = sphi 0, %s18
      %p15 = scmp.ge.s32.totalorder %s14, 4
      %s21 = sphi 0, %s33
      %s22 = sphi 0, %s29
      %s23 = sphi 0, %s21
      %s24 = sphi 0, %s22
      %s25 = sphi 0, %s23
      %s26 = sphi 0, %s24
      %s38 = sphi 0, %s40
      %s41 = sphi 0, %s38
      %s42 = sphi 0, %s41
      %s58 = sphi 0, %s42
      %s62 = sphi 0, %s62
      %s64 = sphi 0, %s62
      %s65 = sphi 0, %s64
      %s79 = sphi 0, %s65
      %s83 = sphi 0, %s83
      %s85 = sphi 0, %s83
      %s86 = sphi 0, %s85
      %s100 = sphi 0, %s86
      %s104 = sphi 0, %s104
      %s106 = sphi 0, %s104
      %s107 = sphi 0, %s106
      %s121 = sphi 0, %s107
      %s125 = sphi 0, %s125
      %s127 = sphi 0, %s125
      %s128 = sphi 0, %s127
      %s142 = sphi 0, %s128
      %s150 = sphi 0, %s152
      %s153 = sphi 0, %s150
      %s154 = sphi 0, %s153
      %s170 = sphi 0, %s154
    $region4: #{tpu_custom_call.1} parent=1 // loop_header_branch
      %17 = sbr.rel (%p15) target = $region8
    $region5: #{tpu_custom_call.1} parent=1 // loop_body
      %s19 = ssub.s32 %s14, 1
      %s20 = ssub.s32 %s14, 2
      %s27 = sadd.s32 1, %s22
      %p28 = scmp.ge.s32.totalorder %s27, 1
      %s29 = scalar_select %p28, 0, %s27
      %s30 = sadd.s32 1, %s21
      %s31 = scalar_select %p28, %s30, %s21
      %p32 = scmp.ge.s32.totalorder %s31, 2
      %s33 = scalar_select %p32, 0, %s31
      %s34 = ssub.s32 %s21, %s33
      %s35 = ssub.s32 %s22, %s29
      %s36 = sor.u32 %s34, %s35
      %p37 = scmp.eq.s32.totalorder %s36, 0
      %s39 = sadd.s32 %s38, 1
      %s40 = scalar_select %p37, %s38, %s39
      %p43 = pneg %p37
      %p44 = scmp.eq.s32.totalorder %s14, 1
      %p45 = por %p43, %p44
      %p46 = scmp.ne.s32.totalorder %s38, %s41
      %p47 = scmp.eq.s32.totalorder %s14, 0
      %p48 = por %p46, %p47
      %p49 = scmp.ne.s32.totalorder %s38, %s41
      %p50 = scmp.eq.s32.totalorder %s19, 1
      %p51 = por %p49, %p50
      %p52 = scmp.ne.s32.totalorder %s41, %s42
      %p53 = scmp.eq.s32.totalorder %s19, 0
      %p54 = por %p52, %p53
      %p55 = scmp.ne.s32.totalorder %s41, %s42
      %p56 = scmp.eq.s32.totalorder %s20, 1
      %p57 = por %p55, %p56
      %p59 = scmp.ne.s32.totalorder %s42, %s58
      %p60 = scmp.eq.s32.totalorder %s20, 0
      %p61 = por %p59, %p60
      %s63 = sadd.s32 %s62, 1
      %p66 = scmp.eq.s32.totalorder %s14, 1
      %p67 = scmp.ne.s32.totalorder %s62, %s64
      %p68 = scmp.eq.s32.totalorder %s14, 0
      %p69 = por %p67, %p68
      %p70 = scmp.ne.s32.totalorder %s62, %s64
      %p71 = scmp.eq.s32.totalorder %s19, 1
      %p72 = por %p70, %p71
      %p73 = scmp.ne.s32.totalorder %s64, %s65
      %p74 = scmp.eq.s32.totalorder %s19, 0
      %p75 = por %p73, %p74
      %p76 = scmp.ne.s32.totalorder %s64, %s65
      %p77 = scmp.eq.s32.totalorder %s20, 1
      %p78 = por %p76, %p77
      %p80 = scmp.ne.s32.totalorder %s65, %s79
      %p81 = scmp.eq.s32.totalorder %s20, 0
      %p82 = por %p80, %p81
      %s84 = sadd.s32 %s83, 1
      %p87 = scmp.eq.s32.totalorder %s14, 1
      %p88 = scmp.ne.s32.totalorder %s83, %s85
      %p89 = scmp.eq.s32.totalorder %s14, 0
      %p90 = por %p88, %p89
      %p91 = scmp.ne.s32.totalorder %s83, %s85
      %p92 = scmp.eq.s32.totalorder %s19, 1
      %p93 = por %p91, %p92
      %p94 = scmp.ne.s32.totalorder %s85, %s86
      %p95 = scmp.eq.s32.totalorder %s19, 0
      %p96 = por %p94, %p95
      %p97 = scmp.ne.s32.totalorder %s85, %s86
      %p98 = scmp.eq.s32.totalorder %s20, 1
      %p99 = por %p97, %p98
      %p101 = scmp.ne.s32.totalorder %s86, %s100
      %p102 = scmp.eq.s32.totalorder %s20, 0
      %p103 = por %p101, %p102
      %s105 = sadd.s32 %s104, 1
      %p108 = scmp.eq.s32.totalorder %s14, 1
      %p109 = scmp.ne.s32.totalorder %s104, %s106
      %p110 = scmp.eq.s32.totalorder %s14, 0
      %p111 = por %p109, %p110
      %p112 = scmp.ne.s32.totalorder %s104, %s106
      %p113 = scmp.eq.s32.totalorder %s19, 1
      %p114 = por %p112, %p113
      %p115 = scmp.ne.s32.totalorder %s106, %s107
      %p116 = scmp.eq.s32.totalorder %s19, 0
      %p117 = por %p115, %p116
      %p118 = scmp.ne.s32.totalorder %s106, %s107
      %p119 = scmp.eq.s32.totalorder %s20, 1
      %p120 = por %p118, %p119
      %p122 = scmp.ne.s32.totalorder %s107, %s121
      %p123 = scmp.eq.s32.totalorder %s20, 0
      %p124 = por %p122, %p123
      %s126 = sadd.s32 %s125, 1
      %p129 = scmp.eq.s32.totalorder %s14, 1
      %p130 = scmp.ne.s32.totalorder %s125, %s127
      %p131 = scmp.eq.s32.totalorder %s14, 0
      %p132 = por %p130, %p131
      %p133 = scmp.ne.s32.totalorder %s125, %s127
      %p134 = scmp.eq.s32.totalorder %s19, 1
      %p135 = por %p133, %p134
      %p136 = scmp.ne.s32.totalorder %s127, %s128
      %p137 = scmp.eq.s32.totalorder %s19, 0
      %p138 = por %p136, %p137
      %p139 = scmp.ne.s32.totalorder %s127, %s128
      %p140 = scmp.eq.s32.totalorder %s20, 1
      %p141 = por %p139, %p140
      %p143 = scmp.ne.s32.totalorder %s128, %s142
      %p144 = scmp.eq.s32.totalorder %s20, 0
      %p145 = por %p143, %p144
      %s146 = ssub.s32 %s21, %s33
      %s147 = ssub.s32 %s22, %s29
      %s148 = sor.u32 %s146, %s147
      %p149 = scmp.eq.s32.totalorder %s148, 0
      %s151 = sadd.s32 %s150, 1
      %s152 = scalar_select %p149, %s150, %s151
      %p155 = pneg %p149
      %p156 = scmp.eq.s32.totalorder %s14, 1
      %p157 = por %p155, %p156
      %p158 = scmp.ne.s32.totalorder %s150, %s153
      %p159 = scmp.eq.s32.totalorder %s14, 0
      %p160 = por %p158, %p159
      %p161 = scmp.ne.s32.totalorder %s150, %s153
      %p162 = scmp.eq.s32.totalorder %s19, 1
      %p163 = por %p161, %p162
      %p164 = scmp.ne.s32.totalorder %s153, %s154
      %p165 = scmp.eq.s32.totalorder %s19, 0
      %p166 = por %p164, %p165
      %p167 = scmp.ne.s32.totalorder %s153, %s154
      %p168 = scmp.eq.s32.totalorder %s20, 1
      %p169 = por %p167, %p168
      %p171 = scmp.ne.s32.totalorder %s154, %s170
      %p172 = scmp.eq.s32.totalorder %s20, 0
      %p173 = por %p171, %p172
      %p174 = scmp.le.s32.totalorder 1, %s14
      %p175 = scmp.lt.s32.totalorder %s14, 3
      %p176 = pnand %p174, %p175
      %p177 = pneg %p176
      // Predicated region
      $region9: #{tpu_custom_call.1} parent=5 // pred_check
        _
      $region10: #{tpu_custom_call.1} parent=5 // pred_check_branch
        %179 = sbr.rel (%p176) target = $region12
      $region11: #{tpu_custom_call.1} parent=5 // pred_region
        %s180 = ssub.s32 %s14, 1
        // Predicated region
        $region13: #{tpu_custom_call.1} parent=11 // pred_check
          %p181 = pneg %p75
        $region14: #{tpu_custom_call.1} parent=11 // pred_check_branch
          %183 = sbr.rel (%p181) target = $region16
        $region15: #{tpu_custom_call.1} parent=11 // pred_region
          _
        $region16: #{tpu_custom_call.1} parent=11 // pred_fallthru
          _
        // Predicated region
        $region17: #{tpu_custom_call.1} parent=11 // pred_check
          %p184 = pneg %p96
        $region18: #{tpu_custom_call.1} parent=11 // pred_check_branch
          %186 = sbr.rel (%p184) target = $region20
        $region19: #{tpu_custom_call.1} parent=11 // pred_region
          _
        $region20: #{tpu_custom_call.1} parent=11 // pred_fallthru
          _
        // Predicated region
        $region21: #{tpu_custom_call.1} parent=11 // pred_check
          %p187 = pneg %p117
        $region22: #{tpu_custom_call.1} parent=11 // pred_check_branch
          %189 = sbr.rel (%p187) target = $region24
        $region23: #{tpu_custom_call.1} parent=11 // pred_region
          _
        $region24: #{tpu_custom_call.1} parent=11 // pred_fallthru
          _
        // Predicated region
        $region25: #{tpu_custom_call.1} parent=11 // pred_check
          %p190 = pneg %p138
        $region26: #{tpu_custom_call.1} parent=11 // pred_check_branch
          %192 = sbr.rel (%p190) target = $region28
        $region27: #{tpu_custom_call.1} parent=11 // pred_region
          _
        $region28: #{tpu_custom_call.1} parent=11 // pred_fallthru
          _
      $region12: #{tpu_custom_call.1} parent=5 // pred_fallthru
        _
      %p193 = scmp.lt.s32.totalorder %s14, 2
      // Predicated region
      $region29: #{tpu_custom_call.1} parent=5 // pred_check
        %p194 = pneg %p193
      $region30: #{tpu_custom_call.1} parent=5 // pred_check_branch
        %196 = sbr.rel (%p194) target = $region32
      $region31: #{tpu_custom_call.1} parent=5 // pred_region
        // Predicated region
        $region33: #{tpu_custom_call.1} parent=31 // pred_check
          %p197 = pneg %p48
        $region34: #{tpu_custom_call.1} parent=31 // pred_check_branch
          %199 = sbr.rel (%p197) target = $region36
        $region35: #{tpu_custom_call.1} parent=31 // pred_region
          %s200 = smul.u32 4, %s21
          %s201 = smul.u32 4, %s22
          %p202 = scmp.lt.s32.totalorder %s200, 7
          %s203 = scalar_select %p202, %s200, 7
          %p204 = scmp.lt.s32.totalorder %s201, 3
          %s205 = scalar_select %p204, %s201, 3
          %s206 = smul.addr %s203, 4
          %s207 = sadd.s32 %s205, %s206
          %s208 = smul.addr %s207, 8
          %s209 = scalar_lea.vmem %s0, %s208
          %s210 = smul.u32 4, %s21
          %s211 = smul.u32 4, %s22
        $region36: #{tpu_custom_call.1} parent=31 // pred_fallthru
          _
      $region32: #{tpu_custom_call.1} parent=5 // pred_fallthru
        _
      %p212 = scmp.le.s32.totalorder 1, %s14
      %p213 = scmp.lt.s32.totalorder %s14, 3
      %p214 = pnand %p212, %p213
      %p215 = pneg %p214
      // Predicated region
      $region37: #{tpu_custom_call.1} parent=5 // pred_check
        _
      $region38: #{tpu_custom_call.1} parent=5 // pred_check_branch
        %217 = sbr.rel (%p214) target = $region40
      $region39: #{tpu_custom_call.1} parent=5 // pred_region
        %s218 = ssub.s32 %s14, 1
        %s219 = smul.u32 4, %s23
        %s220 = smul.u32 4, %s24
        %p221 = scmp.lt.s32.totalorder %s219, 7
        %s222 = scalar_select %p221, %s219, 7
        %p223 = scmp.lt.s32.totalorder %s220, 3
        %s224 = scalar_select %p223, %s220, 3
        %s225 = smul.addr %s222, 4
        %s226 = sadd.s32 %s224, %s225
        %s227 = smul.addr %s226, 8
        %s228 = scalar_lea.vmem %s0, %s227
        %p229 = pneg %p54
        %p230 = pneg %p51
        %p231 = pneg %p75
        %p232 = pneg %p72
        %p233 = pneg %p96
        %p234 = pneg %p93
        %p235 = pneg %p117
        %p236 = pneg %p114
        %p237 = pneg %p138
        %p238 = pneg %p135
        %p239 = pneg %p166
        %p240 = pneg %p163
        %s241 = sand.u32 %s153, 1
        %s242 = scalar_lea.sflag [#allocation3], %s241
        %s243 = sand.u32 %s153, 1
        %s244 = smul.addr %s243, 128
        %s245 = scalar_lea.vmem [#allocation2], %s244
        %s246 = smul.u32 4, %s23
        %s247 = smul.u32 4, %s24
        %p248 = scmp.lt.s32.totalorder %s246, 7
        %s249 = scalar_select %p248, %s246, 7
        %p250 = scmp.lt.s32.totalorder %s247, 3
        %s251 = scalar_select %p250, %s247, 3
        %s252 = smul.addr %s249, 4
        %s253 = sadd.s32 %s251, %s252
        %s254 = smul.addr %s253, 8
        %s255 = scalar_lea.vmem %s0, %s254
        %s256 = smul.u32 4, %s23
        %s257 = smul.u32 4, %s24
        %s258 = smul.u32 4, %s23
        %s259 = smul.u32 4, %s24
        %v260 = vld [vmem:[%s255] sm:$0xff]
        %v261 = vld [vmem:[%s255 + $0x8] sm:$0xff]
        %v262 = vld [vmem:[%s255 + $0x10] sm:$0xff]
        %v263 = vld [vmem:[%s255 + $0x18] sm:$0xff]
        %v264 = vld [vmem:[%s255 + $0x20] sm:$0xff]
        %v265 = vld [vmem:[%s255 + $0x28] sm:$0xff]
        %v266 = vld [vmem:[%s255 + $0x30] sm:$0xff]
        %v267 = vld [vmem:[%s255 + $0x38] sm:$0xff]
        %v268 = vld [vmem:[%s255 + $0x40] sm:$0xff]
        %v269 = vld [vmem:[%s255 + $0x48] sm:$0xff]
        %v270 = vld [vmem:[%s255 + $0x50] sm:$0xff]
        %v271 = vld [vmem:[%s255 + $0x58] sm:$0xff]
        %v272 = vld [vmem:[%s255 + $0x60] sm:$0xff]
        %v273 = vld [vmem:[%s255 + $0x68] sm:$0xff]
        %v274 = vld [vmem:[%s255 + $0x70] sm:$0xff]
        %v275 = vld [vmem:[%s255 + $0x78] sm:$0xff]
        %v276 = vld [vmem:[%s1] sm:$0xff]
        %v277 = vld [vmem:[%s1 + $0x8] sm:$0xff]
        %v278 = vld [vmem:[%s1 + $0x10] sm:$0xff]
        %v279 = vld [vmem:[%s1 + $0x18] sm:$0xff]
        %v280 = vld [vmem:[%s1 + $0x20] sm:$0xff]
        %v281 = vld [vmem:[%s1 + $0x28] sm:$0xff]
        %v282 = vld [vmem:[%s1 + $0x30] sm:$0xff]
        %v283 = vld [vmem:[%s1 + $0x38] sm:$0xff]
        %v284 = vld [vmem:[%s1 + $0x40] sm:$0xff]
        %v285 = vld [vmem:[%s1 + $0x48] sm:$0xff]
        %v286 = vld [vmem:[%s1 + $0x50] sm:$0xff]
        %v287 = vld [vmem:[%s1 + $0x58] sm:$0xff]
        %v288 = vld [vmem:[%s1 + $0x60] sm:$0xff]
        %v289 = vld [vmem:[%s1 + $0x68] sm:$0xff]
        %v290 = vld [vmem:[%s1 + $0x70] sm:$0xff]
        %v291 = vld [vmem:[%s1 + $0x78] sm:$0xff]
        %v292 = vld [vmem:[%s2] sm:$0xff]
        %v293 = vld [vmem:[%s2 + $0x8] sm:$0xff]
        %v294 = vld [vmem:[%s2 + $0x10] sm:$0xff]
        %v295 = vld [vmem:[%s2 + $0x18] sm:$0xff]
        %v296 = vld [vmem:[%s2 + $0x20] sm:$0xff]
        %v297 = vld [vmem:[%s2 + $0x28] sm:$0xff]
        %v298 = vld [vmem:[%s2 + $0x30] sm:$0xff]
        %v299 = vld [vmem:[%s2 + $0x38] sm:$0xff]
        %v300 = vld [vmem:[%s2 + $0x40] sm:$0xff]
        %v301 = vld [vmem:[%s2 + $0x48] sm:$0xff]
        %v302 = vld [vmem:[%s2 + $0x50] sm:$0xff]
        %v303 = vld [vmem:[%s2 + $0x58] sm:$0xff]
        %v304 = vld [vmem:[%s2 + $0x60] sm:$0xff]
        %v305 = vld [vmem:[%s2 + $0x68] sm:$0xff]
        %v306 = vld [vmem:[%s2 + $0x70] sm:$0xff]
        %v307 = vld [vmem:[%s2 + $0x78] sm:$0xff]
        %309 = vset.pattern.permute.xlu0 0
        %310 = vperm.xlu0 %309, %v292
        %v311 = vpop.permute.xlu0 %310
        %314 = vset.pattern.permute.xlu0 0
        %315 = vperm.xlu0 %314, %v293
        %v316 = vpop.permute.xlu0 %315
        %319 = vset.pattern.permute.xlu0 0
        %320 = vperm.xlu0 %319, %v294
        %v321 = vpop.permute.xlu0 %320
        %324 = vset.pattern.permute.xlu0 0
        %325 = vperm.xlu0 %324, %v295
        %v326 = vpop.permute.xlu0 %325
        %329 = vset.pattern.permute.xlu0 0
        %330 = vperm.xlu0 %329, %v296
        %v331 = vpop.permute.xlu0 %330
        %334 = vset.pattern.permute.xlu0 0
        %335 = vperm.xlu0 %334, %v297
        %v336 = vpop.permute.xlu0 %335
        %339 = vset.pattern.permute.xlu0 0
        %340 = vperm.xlu0 %339, %v298
        %v341 = vpop.permute.xlu0 %340
        %344 = vset.pattern.permute.xlu0 0
        %345 = vperm.xlu0 %344, %v299
        %v346 = vpop.permute.xlu0 %345
        %349 = vset.pattern.permute.xlu0 0
        %350 = vperm.xlu0 %349, %v300
        %v351 = vpop.permute.xlu0 %350
        %354 = vset.pattern.permute.xlu0 0
        %355 = vperm.xlu0 %354, %v301
        %v356 = vpop.permute.xlu0 %355
        %359 = vset.pattern.permute.xlu0 0
        %360 = vperm.xlu0 %359, %v302
        %v361 = vpop.permute.xlu0 %360
        %364 = vset.pattern.permute.xlu0 0
        %365 = vperm.xlu0 %364, %v303
        %v366 = vpop.permute.xlu0 %365
        %369 = vset.pattern.permute.xlu0 0
        %370 = vperm.xlu0 %369, %v304
        %v371 = vpop.permute.xlu0 %370
        %374 = vset.pattern.permute.xlu0 0
        %375 = vperm.xlu0 %374, %v305
        %v376 = vpop.permute.xlu0 %375
        %379 = vset.pattern.permute.xlu0 0
        %380 = vperm.xlu0 %379, %v306
        %v381 = vpop.permute.xlu0 %380
        %384 = vset.pattern.permute.xlu0 0
        %385 = vperm.xlu0 %384, %v307
        %v386 = vpop.permute.xlu0 %385
        %vm388 = vcmask 261120
        %v390 = vsel %vm388, %v276, 0
        %v393 = vsel %vm388, %v277, 0
        %v396 = vsel %vm388, %v278, 0
        %v399 = vsel %vm388, %v279, 0
        %v402 = vsel %vm388, %v280, 0
        %v405 = vsel %vm388, %v281, 0
        %v408 = vsel %vm388, %v282, 0
        %v411 = vsel %vm388, %v283, 0
        %v414 = vsel %vm388, %v284, 0
        %v417 = vsel %vm388, %v285, 0
        %v420 = vsel %vm388, %v286, 0
        %v423 = vsel %vm388, %v287, 0
        %v426 = vsel %vm388, %v288, 0
        %v429 = vsel %vm388, %v289, 0
        %v432 = vsel %vm388, %v290, 0
        %v435 = vsel %vm388, %v291, 0
        %437 = vmatprep.subr.mxu0 %v261
        %438 = vmatpush1.msra.mxu0 %v260
        %439 = vmatprep.subr.mxu0 %v265
        %440 = vmatpush1.msra.mxu0 %v264
        %441 = vmatprep.subr.mxu0 %v269
        %442 = vmatpush1.msra.mxu0 %v268
        %443 = vmatprep.subr.mxu0 %v273
        %444 = vmatpush1.msra.mxu0 %v272
        %445 = vmatprep.subr.mxu0 0.0
        %446 = vmatpush1.msra.mxu0 0.0
        %447 = vmatprep.subr.mxu0 0.0
        %448 = vmatpush1.msra.mxu0 0.0
        %449 = vmatprep.subr.mxu0 0.0
        %450 = vmatpush1.msra.mxu0 0.0
        %451 = vmatprep.subr.mxu0 0.0
        %452 = vmatpush1.msra.mxu0 0.0
        %453 = vmatprep.subr.mxu0 0.0
        %454 = vmatpush1.msra.mxu0 0.0
        %455 = vmatprep.subr.mxu0 0.0
        %456 = vmatpush1.msra.mxu0 0.0
        %457 = vmatprep.subr.mxu0 0.0
        %458 = vmatpush1.msra.mxu0 0.0
        %459 = vmatprep.subr.mxu0 0.0
        %460 = vmatpush1.msra.mxu0 0.0
        %461 = vmatprep.subr.mxu0 0.0
        %462 = vmatpush1.msra.mxu0 0.0
        %463 = vmatprep.subr.mxu0 0.0
        %464 = vmatpush1.msra.mxu0 0.0
        %465 = vmatprep.subr.mxu0 0.0
        %466 = vmatpush1.msra.mxu0 0.0
        %467 = vmatprep.subr.mxu0 0.0
        %468 = vmatpush1.msra.mxu0 0.0
        %469 = vmatprep.subr.mxu0 0.0
        %470 = vmatpush1.msra.mxu0 0.0
        %471 = vmatprep.subr.mxu0 0.0
        %472 = vmatpush1.msra.mxu0 0.0
        %473 = vmatprep.subr.mxu0 0.0
        %474 = vmatpush1.msra.mxu0 0.0
        %475 = vmatprep.subr.mxu0 0.0
        %476 = vmatpush1.msra.mxu0 0.0
        %477 = vmatprep.subr.mxu0 0.0
        %478 = vmatpush1.msra.mxu0 0.0
        %479 = vmatprep.subr.mxu0 0.0
        %480 = vmatpush1.msra.mxu0 0.0
        %481 = vmatprep.subr.mxu0 0.0
        %482 = vmatpush1.msra.mxu0 0.0
        %483 = vmatprep.subr.mxu0 0.0
        %484 = vmatpush1.msra.mxu0 0.0
        %485 = vmatprep.subr.mxu0 0.0
        %486 = vmatpush1.msra.mxu0 0.0
        %487 = vmatprep.subr.mxu0 0.0
        %488 = vmatpush1.msra.mxu0 0.0
        %489 = vmatprep.subr.mxu0 0.0
        %490 = vmatpush1.msra.mxu0 0.0
        %491 = vmatprep.subr.mxu0 0.0
        %492 = vmatpush1.msra.mxu0 0.0
        %493 = vmatprep.subr.mxu0 0.0
        %494 = vmatpush1.msra.mxu0 0.0
        %495 = vmatprep.subr.mxu0 0.0
        %496 = vmatpush1.msra.mxu0 0.0
        %497 = vmatprep.subr.mxu0 0.0
        %498 = vmatpush1.msra.mxu0 0.0
        %499 = vmatprep.subr.mxu0 0.0
        %500 = vmatpush1.msra.mxu0 0.0
        %501 = vmatprep.mubr.f32.mxu0 0.0
        %502 = vmatmul.mubr.f32.gmra.mrb[0].mxu0 %v390
        %v503 = vpop.f32.mrb[0].mxu0
        %v504 = vadd.f32 %v311, %v503
        %v505 = vpop.f32.mrb[0].mxu0
        %v506 = vadd.f32 %v311, %v505
        %507 = vmatprep.mubr.f32.mxu0 0.0
        %508 = vmatmul.mubr.f32.gmra.mrb[0].mxu0 %v393
        %v509 = vpop.f32.mrb[0].mxu0
        %v510 = vadd.f32 %v316, %v509
        %v511 = vpop.f32.mrb[0].mxu0
        %v512 = vadd.f32 %v316, %v511
        %513 = vmatprep.mubr.f32.mxu0 0.0
        %514 = vmatmul.mubr.f32.gmra.mrb[0].mxu0 %v396
        %v515 = vpop.f32.mrb[0].mxu0
        %v516 = vadd.f32 %v321, %v515
        %v517 = vpop.f32.mrb[0].mxu0
        %v518 = vadd.f32 %v321, %v517
        %519 = vmatprep.mubr.f32.mxu0 0.0
        %520 = vmatmul.mubr.f32.gmra.mrb[0].mxu0 %v399
        %v521 = vpop.f32.mrb[0].mxu0
        %v522 = vadd.f32 %v326, %v521
        %v523 = vpop.f32.mrb[0].mxu0
        %v524 = vadd.f32 %v326, %v523
        %525 = vmatprep.mubr.f32.mxu0 0.0
        %526 = vmatmul.mubr.f32.gmra.mrb[0].mxu0 %v402
        %v527 = vpop.f32.mrb[0].mxu0
        %v528 = vadd.f32 %v331, %v527
        %v529 = vpop.f32.mrb[0].mxu0
        %v530 = vadd.f32 %v331, %v529
        %531 = vmatprep.mubr.f32.mxu0 0.0
        %532 = vmatmul.mubr.f32.gmra.mrb[0].mxu0 %v405
        %v533 = vpop.f32.mrb[0].mxu0
        %v534 = vadd.f32 %v336, %v533
        %v535 = vpop.f32.mrb[0].mxu0
        %v536 = vadd.f32 %v336, %v535
        %537 = vmatprep.mubr.f32.mxu0 0.0
        %538 = vmatmul.mubr.f32.gmra.mrb[0].mxu0 %v408
        %v539 = vpop.f32.mrb[0].mxu0
        %v540 = vadd.f32 %v341, %v539
        %v541 = vpop.f32.mrb[0].mxu0
        %v542 = vadd.f32 %v341, %v541
        %543 = vmatprep.mubr.f32.mxu0 0.0
        %544 = vmatmul.mubr.f32.gmra.mrb[0].mxu0 %v411
        %v545 = vpop.f32.mrb[0].mxu0
        %v546 = vadd.f32 %v346, %v545
        %v547 = vpop.f32.mrb[0].mxu0
        %v548 = vadd.f32 %v346, %v547
        %549 = vmatprep.mubr.f32.mxu0 0.0
        %550 = vmatmul.mubr.f32.gmra.mrb[0].mxu0 %v414
        %v551 = vpop.f32.mrb[0].mxu0
        %v552 = vadd.f32 %v351, %v551
        %v553 = vpop.f32.mrb[0].mxu0
        %v554 = vadd.f32 %v351, %v553
        %555 = vmatprep.mubr.f32.mxu0 0.0
        %556 = vmatmul.mubr.f32.gmra.mrb[0].mxu0 %v417
        %v557 = vpop.f32.mrb[0].mxu0
        %v558 = vadd.f32 %v356, %v557
        %v559 = vpop.f32.mrb[0].mxu0
        %v560 = vadd.f32 %v356, %v559
        %561 = vmatprep.mubr.f32.mxu0 0.0
        %562 = vmatmul.mubr.f32.gmra.mrb[0].mxu0 %v420
        %v563 = vpop.f32.mrb[0].mxu0
        %v564 = vadd.f32 %v361, %v563
        %v565 = vpop.f32.mrb[0].mxu0
        %v566 = vadd.f32 %v361, %v565
        %567 = vmatprep.mubr.f32.mxu0 0.0
        %568 = vmatmul.mubr.f32.gmra.mrb[0].mxu0 %v423
        %v569 = vpop.f32.mrb[0].mxu0
        %v570 = vadd.f32 %v366, %v569
        %v571 = vpop.f32.mrb[0].mxu0
        %v572 = vadd.f32 %v366, %v571
        %573 = vmatprep.mubr.f32.mxu0 0.0
        %574 = vmatmul.mubr.f32.gmra.mrb[0].mxu0 %v426
        %v575 = vpop.f32.mrb[0].mxu0
        %v576 = vadd.f32 %v371, %v575
        %v577 = vpop.f32.mrb[0].mxu0
        %v578 = vadd.f32 %v371, %v577
        %579 = vmatprep.mubr.f32.mxu0 0.0
        %580 = vmatmul.mubr.f32.gmra.mrb[0].mxu0 %v429
        %v581 = vpop.f32.mrb[0].mxu0
        %v582 = vadd.f32 %v376, %v581
        %v583 = vpop.f32.mrb[0].mxu0
        %v584 = vadd.f32 %v376, %v583
        %585 = vmatprep.mubr.f32.mxu0 0.0
        %586 = vmatmul.mubr.f32.gmra.mrb[0].mxu0 %v432
        %v587 = vpop.f32.mrb[0].mxu0
        %v588 = vadd.f32 %v381, %v587
        %v589 = vpop.f32.mrb[0].mxu0
        %v590 = vadd.f32 %v381, %v589
        %591 = vmatprep.mubr.f32.mxu0 0.0
        %592 = vmatmul.mubr.f32.gmra.mrb[0].mxu0 %v435
        %v593 = vpop.f32.mrb[0].mxu0
        %v594 = vadd.f32 %v386, %v593
        %v595 = vpop.f32.mrb[0].mxu0
        %v596 = vadd.f32 %v386, %v595
        %597 = vdwg.mxu0
        %598 = vmatprep.subr.mxu0 %v263
        %599 = vmatpush1.msra.mxu0 %v262
        %600 = vmatprep.subr.mxu0 %v267
        %601 = vmatpush1.msra.mxu0 %v266
        %602 = vmatprep.subr.mxu0 %v271
        %603 = vmatpush1.msra.mxu0 %v270
        %604 = vmatprep.subr.mxu0 %v275
        %605 = vmatpush1.msra.mxu0 %v274
        %606 = vmatprep.subr.mxu0 0.0
        %607 = vmatpush1.msra.mxu0 0.0
        %608 = vmatprep.subr.mxu0 0.0
        %609 = vmatpush1.msra.mxu0 0.0
        %610 = vmatprep.subr.mxu0 0.0
        %611 = vmatpush1.msra.mxu0 0.0
        %612 = vmatprep.subr.mxu0 0.0
        %613 = vmatpush1.msra.mxu0 0.0
        %614 = vmatprep.subr.mxu0 0.0
        %615 = vmatpush1.msra.mxu0 0.0
        %616 = vmatprep.subr.mxu0 0.0
        %617 = vmatpush1.msra.mxu0 0.0
        %618 = vmatprep.subr.mxu0 0.0
        %619 = vmatpush1.msra.mxu0 0.0
        %620 = vmatprep.subr.mxu0 0.0
        %621 = vmatpush1.msra.mxu0 0.0
        %622 = vmatprep.subr.mxu0 0.0
        %623 = vmatpush1.msra.mxu0 0.0
        %624 = vmatprep.subr.mxu0 0.0
        %625 = vmatpush1.msra.mxu0 0.0
        %626 = vmatprep.subr.mxu0 0.0
        %627 = vmatpush1.msra.mxu0 0.0
        %628 = vmatprep.subr.mxu0 0.0
        %629 = vmatpush1.msra.mxu0 0.0
        %630 = vmatprep.subr.mxu0 0.0
        %631 = vmatpush1.msra.mxu0 0.0
        %632 = vmatprep.subr.mxu0 0.0
        %633 = vmatpush1.msra.mxu0 0.0
        %634 = vmatprep.subr.mxu0 0.0
        %635 = vmatpush1.msra.mxu0 0.0
        %636 = vmatprep.subr.mxu0 0.0
        %637 = vmatpush1.msra.mxu0 0.0
        %638 = vmatprep.subr.mxu0 0.0
        %639 = vmatpush1.msra.mxu0 0.0
        %640 = vmatprep.subr.mxu0 0.0
        %641 = vmatpush1.msra.mxu0 0.0
        %642 = vmatprep.subr.mxu0 0.0
        %643 = vmatpush1.msra.mxu0 0.0
        %644 = vmatprep.subr.mxu0 0.0
        %645 = vmatpush1.msra.mxu0 0.0
        %646 = vmatprep.subr.mxu0 0.0
        %647 = vmatpush1.msra.mxu0 0.0
        %648 = vmatprep.subr.mxu0 0.0
        %649 = vmatpush1.msra.mxu0 0.0
        %650 = vmatprep.subr.mxu0 0.0
        %651 = vmatpush1.msra.mxu0 0.0
        %652 = vmatprep.subr.mxu0 0.0
        %653 = vmatpush1.msra.mxu0 0.0
        %654 = vmatprep.subr.mxu0 0.0
        %655 = vmatpush1.msra.mxu0 0.0
        %656 = vmatprep.subr.mxu0 0.0
        %657 = vmatpush1.msra.mxu0 0.0
        %658 = vmatprep.subr.mxu0 0.0
        %659 = vmatpush1.msra.mxu0 0.0
        %660 = vmatprep.subr.mxu0 0.0
        %661 = vmatpush1.msra.mxu0 0.0
        %662 = vmatprep.mubr.f32.mxu0 0.0
        %663 = vmatmul.mubr.f32.gmra.mrb[0].mxu0 %v390
        %v664 = vpop.f32.mrb[0].mxu0
        %v665 = vadd.f32 %v311, %v664
        %v666 = vpop.f32.mrb[0].mxu0
        %v667 = vadd.f32 %v311, %v666
        %668 = vmatprep.mubr.f32.mxu0 0.0
        %669 = vmatmul.mubr.f32.gmra.mrb[0].mxu0 %v393
        %v670 = vpop.f32.mrb[0].mxu0
        %v671 = vadd.f32 %v316, %v670
        %v672 = vpop.f32.mrb[0].mxu0
        %v673 = vadd.f32 %v316, %v672
        %674 = vmatprep.mubr.f32.mxu0 0.0
        %675 = vmatmul.mubr.f32.gmra.mrb[0].mxu0 %v396
        %v676 = vpop.f32.mrb[0].mxu0
        %v677 = vadd.f32 %v321, %v676
        %v678 = vpop.f32.mrb[0].mxu0
        %v679 = vadd.f32 %v321, %v678
        %680 = vmatprep.mubr.f32.mxu0 0.0
        %681 = vmatmul.mubr.f32.gmra.mrb[0].mxu0 %v399
        %v682 = vpop.f32.mrb[0].mxu0
        %v683 = vadd.f32 %v326, %v682
        %v684 = vpop.f32.mrb[0].mxu0
        %v685 = vadd.f32 %v326, %v684
        %686 = vmatprep.mubr.f32.mxu0 0.0
        %687 = vmatmul.mubr.f32.gmra.mrb[0].mxu0 %v402
        %v688 = vpop.f32.mrb[0].mxu0
        %v689 = vadd.f32 %v331, %v688
        %v690 = vpop.f32.mrb[0].mxu0
        %v691 = vadd.f32 %v331, %v690
        %692 = vmatprep.mubr.f32.mxu0 0.0
        %693 = vmatmul.mubr.f32.gmra.mrb[0].mxu0 %v405
        %v694 = vpop.f32.mrb[0].mxu0
        %v695 = vadd.f32 %v336, %v694
        %v696 = vpop.f32.mrb[0].mxu0
        %v697 = vadd.f32 %v336, %v696
        %698 = vmatprep.mubr.f32.mxu0 0.0
        %699 = vmatmul.mubr.f32.gmra.mrb[0].mxu0 %v408
        %v700 = vpop.f32.mrb[0].mxu0
        %v701 = vadd.f32 %v341, %v700
        %v702 = vpop.f32.mrb[0].mxu0
        %v703 = vadd.f32 %v341, %v702
        %704 = vmatprep.mubr.f32.mxu0 0.0
        %705 = vmatmul.mubr.f32.gmra.mrb[0].mxu0 %v411
        %v706 = vpop.f32.mrb[0].mxu0
        %v707 = vadd.f32 %v346, %v706
        %v708 = vpop.f32.mrb[0].mxu0
        %v709 = vadd.f32 %v346, %v708
        %710 = vmatprep.mubr.f32.mxu0 0.0
        %711 = vmatmul.mubr.f32.gmra.mrb[0].mxu0 %v414
        %v712 = vpop.f32.mrb[0].mxu0
        %v713 = vadd.f32 %v351, %v712
        %v714 = vpop.f32.mrb[0].mxu0
        %v715 = vadd.f32 %v351, %v714
        %716 = vmatprep.mubr.f32.mxu0 0.0
        %717 = vmatmul.mubr.f32.gmra.mrb[0].mxu0 %v417
        %v718 = vpop.f32.mrb[0].mxu0
        %v719 = vadd.f32 %v356, %v718
        %v720 = vpop.f32.mrb[0].mxu0
        %v721 = vadd.f32 %v356, %v720
        %722 = vmatprep.mubr.f32.mxu0 0.0
        %723 = vmatmul.mubr.f32.gmra.mrb[0].mxu0 %v420
        %v724 = vpop.f32.mrb[0].mxu0
        %v725 = vadd.f32 %v361, %v724
        %v726 = vpop.f32.mrb[0].mxu0
        %v727 = vadd.f32 %v361, %v726
        %728 = vmatprep.mubr.f32.mxu0 0.0
        %729 = vmatmul.mubr.f32.gmra.mrb[0].mxu0 %v423
        %v730 = vpop.f32.mrb[0].mxu0
        %v731 = vadd.f32 %v366, %v730
        %v732 = vpop.f32.mrb[0].mxu0
        %v733 = vadd.f32 %v366, %v732
        %734 = vmatprep.mubr.f32.mxu0 0.0
        %735 = vmatmul.mubr.f32.gmra.mrb[0].mxu0 %v426
        %v736 = vpop.f32.mrb[0].mxu0
        %v737 = vadd.f32 %v371, %v736
        %v738 = vpop.f32.mrb[0].mxu0
        %v739 = vadd.f32 %v371, %v738
        %740 = vmatprep.mubr.f32.mxu0 0.0
        %741 = vmatmul.mubr.f32.gmra.mrb[0].mxu0 %v429
        %v742 = vpop.f32.mrb[0].mxu0
        %v743 = vadd.f32 %v376, %v742
        %v744 = vpop.f32.mrb[0].mxu0
        %v745 = vadd.f32 %v376, %v744
        %746 = vmatprep.mubr.f32.mxu0 0.0
        %747 = vmatmul.mubr.f32.gmra.mrb[0].mxu0 %v432
        %v748 = vpop.f32.mrb[0].mxu0
        %v749 = vadd.f32 %v381, %v748
        %v750 = vpop.f32.mrb[0].mxu0
        %v751 = vadd.f32 %v381, %v750
        %752 = vmatprep.mubr.f32.mxu0 0.0
        %753 = vmatmul.mubr.f32.gmra.mrb[0].mxu0 %v435
        %v754 = vpop.f32.mrb[0].mxu0
        %v755 = vadd.f32 %v386, %v754
        %v756 = vpop.f32.mrb[0].mxu0
        %v757 = vadd.f32 %v386, %v756
        %758 = vdwg.mxu0
        %v759 = vmul.f32 %v504, 0.5
        %v760 = vmul.f32 %v506, 0.5
        %v761 = vmul.f32 %v665, 0.5
        %v762 = vmul.f32 %v667, 0.5
        %v763 = vmul.f32 %v510, 0.5
        %v764 = vmul.f32 %v512, 0.5
        %v765 = vmul.f32 %v671, 0.5
        %v766 = vmul.f32 %v673, 0.5
        %v767 = vmul.f32 %v516, 0.5
        %v768 = vmul.f32 %v518, 0.5
        %v769 = vmul.f32 %v677, 0.5
        %v770 = vmul.f32 %v679, 0.5
        %v771 = vmul.f32 %v522, 0.5
        %v772 = vmul.f32 %v524, 0.5
        %v773 = vmul.f32 %v683, 0.5
        %v774 = vmul.f32 %v685, 0.5
        %v775 = vmul.f32 %v528, 0.5
        %v776 = vmul.f32 %v530, 0.5
        %v777 = vmul.f32 %v689, 0.5
        %v778 = vmul.f32 %v691, 0.5
        %v779 = vmul.f32 %v534, 0.5
        %v780 = vmul.f32 %v536, 0.5
        %v781 = vmul.f32 %v695, 0.5
        %v782 = vmul.f32 %v697, 0.5
        %v783 = vmul.f32 %v540, 0.5
        %v784 = vmul.f32 %v542, 0.5
        %v785 = vmul.f32 %v701, 0.5
        %v786 = vmul.f32 %v703, 0.5
        %v787 = vmul.f32 %v546, 0.5
        %v788 = vmul.f32 %v548, 0.5
        %v789 = vmul.f32 %v707, 0.5
        %v790 = vmul.f32 %v709, 0.5
        %v791 = vmul.f32 %v552, 0.5
        %v792 = vmul.f32 %v554, 0.5
        %v793 = vmul.f32 %v713, 0.5
        %v794 = vmul.f32 %v715, 0.5
        %v795 = vmul.f32 %v558, 0.5
        %v796 = vmul.f32 %v560, 0.5
        %v797 = vmul.f32 %v719, 0.5
        %v798 = vmul.f32 %v721, 0.5
        %v799 = vmul.f32 %v564, 0.5
        %v800 = vmul.f32 %v566, 0.5
        %v801 = vmul.f32 %v725, 0.5
        %v802 = vmul.f32 %v727, 0.5
        %v803 = vmul.f32 %v570, 0.5
        %v804 = vmul.f32 %v572, 0.5
        %v805 = vmul.f32 %v731, 0.5
        %v806 = vmul.f32 %v733, 0.5
        %v807 = vmul.f32 %v576, 0.5
        %v808 = vmul.f32 %v578, 0.5
        %v809 = vmul.f32 %v737, 0.5
        %v810 = vmul.f32 %v739, 0.5
        %v811 = vmul.f32 %v582, 0.5
        %v812 = vmul.f32 %v584, 0.5
        %v813 = vmul.f32 %v743, 0.5
        %v814 = vmul.f32 %v745, 0.5
        %v815 = vmul.f32 %v588, 0.5
        %v816 = vmul.f32 %v590, 0.5
        %v817 = vmul.f32 %v749, 0.5
        %v818 = vmul.f32 %v751, 0.5
        %v819 = vmul.f32 %v594, 0.5
        %v820 = vmul.f32 %v596, 0.5
        %v821 = vmul.f32 %v755, 0.5
        %v822 = vmul.f32 %v757, 0.5
        %v823 = vmul.f32 %v504, 0.70710677
        %v824 = vmul.f32 %v506, 0.70710677
        %v825 = vmul.f32 %v665, 0.70710677
        %v826 = vmul.f32 %v667, 0.70710677
        %v827 = vmul.f32 %v510, 0.70710677
        %v828 = vmul.f32 %v512, 0.70710677
        %v829 = vmul.f32 %v671, 0.70710677
        %v830 = vmul.f32 %v673, 0.70710677
        %v831 = vmul.f32 %v516, 0.70710677
        %v832 = vmul.f32 %v518, 0.70710677
        %v833 = vmul.f32 %v677, 0.70710677
        %v834 = vmul.f32 %v679, 0.70710677
        %v835 = vmul.f32 %v522, 0.70710677
        %v836 = vmul.f32 %v524, 0.70710677
        %v837 = vmul.f32 %v683, 0.70710677
        %v838 = vmul.f32 %v685, 0.70710677
        %v839 = vmul.f32 %v528, 0.70710677
        %v840 = vmul.f32 %v530, 0.70710677
        %v841 = vmul.f32 %v689, 0.70710677
        %v842 = vmul.f32 %v691, 0.70710677
        %v843 = vmul.f32 %v534, 0.70710677
        %v844 = vmul.f32 %v536, 0.70710677
        %v845 = vmul.f32 %v695, 0.70710677
        %v846 = vmul.f32 %v697, 0.70710677
        %v847 = vmul.f32 %v540, 0.70710677
        %v848 = vmul.f32 %v542, 0.70710677
        %v849 = vmul.f32 %v701, 0.70710677
        %v850 = vmul.f32 %v703, 0.70710677
        %v851 = vmul.f32 %v546, 0.70710677
        %v852 = vmul.f32 %v548, 0.70710677
        %v853 = vmul.f32 %v707, 0.70710677
        %v854 = vmul.f32 %v709, 0.70710677
        %v855 = vmul.f32 %v552, 0.70710677
        %v856 = vmul.f32 %v554, 0.70710677
        %v857 = vmul.f32 %v713, 0.70710677
        %v858 = vmul.f32 %v715, 0.70710677
        %v859 = vmul.f32 %v558, 0.70710677
        %v860 = vmul.f32 %v560, 0.70710677
        %v861 = vmul.f32 %v719, 0.70710677
        %v862 = vmul.f32 %v721, 0.70710677
        %v863 = vmul.f32 %v564, 0.70710677
        %v864 = vmul.f32 %v566, 0.70710677
        %v865 = vmul.f32 %v725, 0.70710677
        %v866 = vmul.f32 %v727, 0.70710677
        %v867 = vmul.f32 %v570, 0.70710677
        %v868 = vmul.f32 %v572, 0.70710677
        %v869 = vmul.f32 %v731, 0.70710677
        %v870 = vmul.f32 %v733, 0.70710677
        %v871 = vmul.f32 %v576, 0.70710677
        %v872 = vmul.f32 %v578, 0.70710677
        %v873 = vmul.f32 %v737, 0.70710677
        %v874 = vmul.f32 %v739, 0.70710677
        %v875 = vmul.f32 %v582, 0.70710677
        %v876 = vmul.f32 %v584, 0.70710677
        %v877 = vmul.f32 %v743, 0.70710677
        %v878 = vmul.f32 %v745, 0.70710677
        %v879 = vmul.f32 %v588, 0.70710677
        %v880 = vmul.f32 %v590, 0.70710677
        %v881 = vmul.f32 %v749, 0.70710677
        %v882 = vmul.f32 %v751, 0.70710677
        %v883 = vmul.f32 %v594, 0.70710677
        %v884 = vmul.f32 %v596, 0.70710677
        %v885 = vmul.f32 %v755, 0.70710677
        %v886 = vmul.f32 %v757, 0.70710677
        %v887 = verf.f32.pop %v823
        %v888 = verf.f32.pop %v824
        %v889 = verf.f32.pop %v825
        %v890 = verf.f32.pop %v826
        %v891 = verf.f32.pop %v827
        %v892 = verf.f32.pop %v828
        %v893 = verf.f32.pop %v829
        %v894 = verf.f32.pop %v830
        %v895 = verf.f32.pop %v831
        %v896 = verf.f32.pop %v832
        %v897 = verf.f32.pop %v833
        %v898 = verf.f32.pop %v834
        %v899 = verf.f32.pop %v835
        %v900 = verf.f32.pop %v836
        %v901 = verf.f32.pop %v837
        %v902 = verf.f32.pop %v838
        %v903 = verf.f32.pop %v839
        %v904 = verf.f32.pop %v840
        %v905 = verf.f32.pop %v841
        %v906 = verf.f32.pop %v842
        %v907 = verf.f32.pop %v843
        %v908 = verf.f32.pop %v844
        %v909 = verf.f32.pop %v845
        %v910 = verf.f32.pop %v846
        %v911 = verf.f32.pop %v847
        %v912 = verf.f32.pop %v848
        %v913 = verf.f32.pop %v849
        %v914 = verf.f32.pop %v850
        %v915 = verf.f32.pop %v851
        %v916 = verf.f32.pop %v852
        %v917 = verf.f32.pop %v853
        %v918 = verf.f32.pop %v854
        %v919 = verf.f32.pop %v855
        %v920 = verf.f32.pop %v856
        %v921 = verf.f32.pop %v857
        %v922 = verf.f32.pop %v858
        %v923 = verf.f32.pop %v859
        %v924 = verf.f32.pop %v860
        %v925 = verf.f32.pop %v861
        %v926 = verf.f32.pop %v862
        %v927 = verf.f32.pop %v863
        %v928 = verf.f32.pop %v864
        %v929 = verf.f32.pop %v865
        %v930 = verf.f32.pop %v866
        %v931 = verf.f32.pop %v867
        %v932 = verf.f32.pop %v868
        %v933 = verf.f32.pop %v869
        %v934 = verf.f32.pop %v870
        %v935 = verf.f32.pop %v871
        %v936 = verf.f32.pop %v872
        %v937 = verf.f32.pop %v873
        %v938 = verf.f32.pop %v874
        %v939 = verf.f32.pop %v875
        %v940 = verf.f32.pop %v876
        %v941 = verf.f32.pop %v877
        %v942 = verf.f32.pop %v878
        %v943 = verf.f32.pop %v879
        %v944 = verf.f32.pop %v880
        %v945 = verf.f32.pop %v881
        %v946 = verf.f32.pop %v882
        %v947 = verf.f32.pop %v883
        %v948 = verf.f32.pop %v884
        %v949 = verf.f32.pop %v885
        %v950 = verf.f32.pop %v886
        %v951 = vadd.f32 %v887, 1.0
        %v952 = vadd.f32 %v888, 1.0
        %v953 = vadd.f32 %v889, 1.0
        %v954 = vadd.f32 %v890, 1.0
        %v955 = vadd.f32 %v891, 1.0
        %v956 = vadd.f32 %v892, 1.0
        %v957 = vadd.f32 %v893, 1.0
        %v958 = vadd.f32 %v894, 1.0
        %v959 = vadd.f32 %v895, 1.0
        %v960 = vadd.f32 %v896, 1.0
        %v961 = vadd.f32 %v897, 1.0
        %v962 = vadd.f32 %v898, 1.0
        %v963 = vadd.f32 %v899, 1.0
        %v964 = vadd.f32 %v900, 1.0
        %v965 = vadd.f32 %v901, 1.0
        %v966 = vadd.f32 %v902, 1.0
        %v967 = vadd.f32 %v903, 1.0
        %v968 = vadd.f32 %v904, 1.0
        %v969 = vadd.f32 %v905, 1.0
        %v970 = vadd.f32 %v906, 1.0
        %v971 = vadd.f32 %v907, 1.0
        %v972 = vadd.f32 %v908, 1.0
        %v973 = vadd.f32 %v909, 1.0
        %v974 = vadd.f32 %v910, 1.0
        %v975 = vadd.f32 %v911, 1.0
        %v976 = vadd.f32 %v912, 1.0
        %v977 = vadd.f32 %v913, 1.0
        %v978 = vadd.f32 %v914, 1.0
        %v979 = vadd.f32 %v915, 1.0
        %v980 = vadd.f32 %v916, 1.0
        %v981 = vadd.f32 %v917, 1.0
        %v982 = vadd.f32 %v918, 1.0
        %v983 = vadd.f32 %v919, 1.0
        %v984 = vadd.f32 %v920, 1.0
        %v985 = vadd.f32 %v921, 1.0
        %v986 = vadd.f32 %v922, 1.0
        %v987 = vadd.f32 %v923, 1.0
        %v988 = vadd.f32 %v924, 1.0
        %v989 = vadd.f32 %v925, 1.0
        %v990 = vadd.f32 %v926, 1.0
        %v991 = vadd.f32 %v927, 1.0
        %v992 = vadd.f32 %v928, 1.0
        %v993 = vadd.f32 %v929, 1.0
        %v994 = vadd.f32 %v930, 1.0
        %v995 = vadd.f32 %v931, 1.0
        %v996 = vadd.f32 %v932, 1.0
        %v997 = vadd.f32 %v933, 1.0
        %v998 = vadd.f32 %v934, 1.0
        %v999 = vadd.f32 %v935, 1.0
        %v1000 = vadd.f32 %v936, 1.0
        %v1001 = vadd.f32 %v937, 1.0
        %v1002 = vadd.f32 %v938, 1.0
        %v1003 = vadd.f32 %v939, 1.0
        %v1004 = vadd.f32 %v940, 1.0
        %v1005 = vadd.f32 %v941, 1.0
        %v1006 = vadd.f32 %v942, 1.0
        %v1007 = vadd.f32 %v943, 1.0
        %v1008 = vadd.f32 %v944, 1.0
        %v1009 = vadd.f32 %v945, 1.0
        %v1010 = vadd.f32 %v946, 1.0
        %v1011 = vadd.f32 %v947, 1.0
        %v1012 = vadd.f32 %v948, 1.0
        %v1013 = vadd.f32 %v949, 1.0
        %v1014 = vadd.f32 %v950, 1.0
        %v1015 = vmul.f32 %v759, %v951
        %v1016 = vmul.f32 %v760, %v952
        %v1017 = vmul.f32 %v761, %v953
        %v1018 = vmul.f32 %v762, %v954
        %v1019 = vmul.f32 %v763, %v955
        %v1020 = vmul.f32 %v764, %v956
        %v1021 = vmul.f32 %v765, %v957
        %v1022 = vmul.f32 %v766, %v958
        %v1023 = vmul.f32 %v767, %v959
        %v1024 = vmul.f32 %v768, %v960
        %v1025 = vmul.f32 %v769, %v961
        %v1026 = vmul.f32 %v770, %v962
        %v1027 = vmul.f32 %v771, %v963
        %v1028 = vmul.f32 %v772, %v964
        %v1029 = vmul.f32 %v773, %v965
        %v1030 = vmul.f32 %v774, %v966
        %v1031 = vmul.f32 %v775, %v967
        %v1032 = vmul.f32 %v776, %v968
        %v1033 = vmul.f32 %v777, %v969
        %v1034 = vmul.f32 %v778, %v970
        %v1035 = vmul.f32 %v779, %v971
        %v1036 = vmul.f32 %v780, %v972
        %v1037 = vmul.f32 %v781, %v973
        %v1038 = vmul.f32 %v782, %v974
        %v1039 = vmul.f32 %v783, %v975
        %v1040 = vmul.f32 %v784, %v976
        %v1041 = vmul.f32 %v785, %v977
        %v1042 = vmul.f32 %v786, %v978
        %v1043 = vmul.f32 %v787, %v979
        %v1044 = vmul.f32 %v788, %v980
        %v1045 = vmul.f32 %v789, %v981
        %v1046 = vmul.f32 %v790, %v982
        %v1047 = vmul.f32 %v791, %v983
        %v1048 = vmul.f32 %v792, %v984
        %v1049 = vmul.f32 %v793, %v985
        %v1050 = vmul.f32 %v794, %v986
        %v1051 = vmul.f32 %v795, %v987
        %v1052 = vmul.f32 %v796, %v988
        %v1053 = vmul.f32 %v797, %v989
        %v1054 = vmul.f32 %v798, %v990
        %v1055 = vmul.f32 %v799, %v991
        %v1056 = vmul.f32 %v800, %v992
        %v1057 = vmul.f32 %v801, %v993
        %v1058 = vmul.f32 %v802, %v994
        %v1059 = vmul.f32 %v803, %v995
        %v1060 = vmul.f32 %v804, %v996
        %v1061 = vmul.f32 %v805, %v997
        %v1062 = vmul.f32 %v806, %v998
        %v1063 = vmul.f32 %v807, %v999
        %v1064 = vmul.f32 %v808, %v1000
        %v1065 = vmul.f32 %v809, %v1001
        %v1066 = vmul.f32 %v810, %v1002
        %v1067 = vmul.f32 %v811, %v1003
        %v1068 = vmul.f32 %v812, %v1004
        %v1069 = vmul.f32 %v813, %v1005
        %v1070 = vmul.f32 %v814, %v1006
        %v1071 = vmul.f32 %v815, %v1007
        %v1072 = vmul.f32 %v816, %v1008
        %v1073 = vmul.f32 %v817, %v1009
        %v1074 = vmul.f32 %v818, %v1010
        %v1075 = vmul.f32 %v819, %v1011
        %v1076 = vmul.f32 %v820, %v1012
        %v1077 = vmul.f32 %v821, %v1013
        %v1078 = vmul.f32 %v822, %v1014
        %v1079 = vld [vmem:[%s3] sm:$0xff]
        %v1080 = vld [vmem:[%s3 + $0x8] sm:$0xff]
        %v1081 = vld [vmem:[%s3 + $0x10] sm:$0xff]
        %v1082 = vld [vmem:[%s3 + $0x18] sm:$0xff]
        %v1083 = vld [vmem:[%s4] sm:$0xff]
        %v1084 = vld [vmem:[%s4 + $0x8] sm:$0xff]
        %v1085 = vld [vmem:[%s4 + $0x10] sm:$0xff]
        %v1086 = vld [vmem:[%s4 + $0x18] sm:$0xff]
        %1088 = vset.pattern.permute.xlu0 0
        %1089 = vperm.xlu0 %1088, %v1083
        %v1090 = vpop.permute.xlu0 %1089
        %1093 = vset.pattern.permute.xlu0 0
        %1094 = vperm.xlu0 %1093, %v1084
        %v1095 = vpop.permute.xlu0 %1094
        %1098 = vset.pattern.permute.xlu0 0
        %1099 = vperm.xlu0 %1098, %v1085
        %v1100 = vpop.permute.xlu0 %1099
        %1103 = vset.pattern.permute.xlu0 0
        %1104 = vperm.xlu0 %1103, %v1086
        %v1105 = vpop.permute.xlu0 %1104
        %1107 = vmatprep.subr.mxu0 %v1016
        %1108 = vmatpush1.msra.mxu0 %v1015
        %1109 = vmatprep.subr.mxu0 %v1020
        %1110 = vmatpush1.msra.mxu0 %v1019
        %1111 = vmatprep.subr.mxu0 %v1024
        %1112 = vmatpush1.msra.mxu0 %v1023
        %1113 = vmatprep.subr.mxu0 %v1028
        %1114 = vmatpush1.msra.mxu0 %v1027
        %1115 = vmatprep.subr.mxu0 %v1032
        %1116 = vmatpush1.msra.mxu0 %v1031
        %1117 = vmatprep.subr.mxu0 %v1036
        %1118 = vmatpush1.msra.mxu0 %v1035
        %1119 = vmatprep.subr.mxu0 %v1040
        %1120 = vmatpush1.msra.mxu0 %v1039
        %1121 = vmatprep.subr.mxu0 %v1044
        %1122 = vmatpush1.msra.mxu0 %v1043
        %1123 = vmatprep.subr.mxu0 %v1048
        %1124 = vmatpush1.msra.mxu0 %v1047
        %1125 = vmatprep.subr.mxu0 %v1052
        %1126 = vmatpush1.msra.mxu0 %v1051
        %1127 = vmatprep.subr.mxu0 %v1056
        %1128 = vmatpush1.msra.mxu0 %v1055
        %1129 = vmatprep.subr.mxu0 %v1060
        %1130 = vmatpush1.msra.mxu0 %v1059
        %1131 = vmatprep.subr.mxu0 %v1064
        %1132 = vmatpush1.msra.mxu0 %v1063
        %1133 = vmatprep.subr.mxu0 %v1068
        %1134 = vmatpush1.msra.mxu0 %v1067
        %1135 = vmatprep.subr.mxu0 %v1072
        %1136 = vmatpush1.msra.mxu0 %v1071
        %1137 = vmatprep.subr.mxu0 %v1076
        %1138 = vmatpush1.msra.mxu0 %v1075
        %1139 = vmatprep.subr.mxu0 0.0
        %1140 = vmatpush1.msra.mxu0 0.0
        %1141 = vmatprep.subr.mxu0 0.0
        %1142 = vmatpush1.msra.mxu0 0.0
        %1143 = vmatprep.subr.mxu0 0.0
        %1144 = vmatpush1.msra.mxu0 0.0
        %1145 = vmatprep.subr.mxu0 0.0
        %1146 = vmatpush1.msra.mxu0 0.0
        %1147 = vmatprep.subr.mxu0 0.0
        %1148 = vmatpush1.msra.mxu0 0.0
        %1149 = vmatprep.subr.mxu0 0.0
        %1150 = vmatpush1.msra.mxu0 0.0
        %1151 = vmatprep.subr.mxu0 0.0
        %1152 = vmatpush1.msra.mxu0 0.0
        %1153 = vmatprep.subr.mxu0 0.0
        %1154 = vmatpush1.msra.mxu0 0.0
        %1155 = vmatprep.subr.mxu0 0.0
        %1156 = vmatpush1.msra.mxu0 0.0
        %1157 = vmatprep.subr.mxu0 0.0
        %1158 = vmatpush1.msra.mxu0 0.0
        %1159 = vmatprep.subr.mxu0 0.0
        %1160 = vmatpush1.msra.mxu0 0.0
        %1161 = vmatprep.subr.mxu0 0.0
        %1162 = vmatpush1.msra.mxu0 0.0
        %1163 = vmatprep.subr.mxu0 0.0
        %1164 = vmatpush1.msra.mxu0 0.0
        %1165 = vmatprep.subr.mxu0 0.0
        %1166 = vmatpush1.msra.mxu0 0.0
        %1167 = vmatprep.subr.mxu0 0.0
        %1168 = vmatpush1.msra.mxu0 0.0
        %1169 = vmatprep.subr.mxu0 0.0
        %1170 = vmatpush1.msra.mxu0 0.0
        %1171 = vmatprep.mubr.f32.mxu0 0.0
        %1172 = vmatmul.mubr.f32.gmra.mrb[0].mxu0 %v1079
        %v1173 = vpop.f32.mrb[0].mxu0
        %v1174 = vadd.f32 %v1090, %v1173
        %v1175 = vpop.f32.mrb[0].mxu0
        %v1176 = vadd.f32 %v1090, %v1175
        %1177 = vmatprep.mubr.f32.mxu0 0.0
        %1178 = vmatmul.mubr.f32.gmra.mrb[0].mxu0 %v1080
        %v1179 = vpop.f32.mrb[0].mxu0
        %v1180 = vadd.f32 %v1095, %v1179
        %v1181 = vpop.f32.mrb[0].mxu0
        %v1182 = vadd.f32 %v1095, %v1181
        %1183 = vmatprep.mubr.f32.mxu0 0.0
        %1184 = vmatmul.mubr.f32.gmra.mrb[0].mxu0 %v1081
        %v1185 = vpop.f32.mrb[0].mxu0
        %v1186 = vadd.f32 %v1100, %v1185
        %v1187 = vpop.f32.mrb[0].mxu0
        %v1188 = vadd.f32 %v1100, %v1187
        %1189 = vmatprep.mubr.f32.mxu0 0.0
        %1190 = vmatmul.mubr.f32.gmra.mrb[0].mxu0 %v1082
        %v1191 = vpop.f32.mrb[0].mxu0
        %v1192 = vadd.f32 %v1105, %v1191
        %v1193 = vpop.f32.mrb[0].mxu0
        %v1194 = vadd.f32 %v1105, %v1193
        %1195 = vdwg.mxu0
        %1196 = vmatprep.subr.mxu0 %v1018
        %1197 = vmatpush1.msra.mxu0 %v1017
        %1198 = vmatprep.subr.mxu0 %v1022
        %1199 = vmatpush1.msra.mxu0 %v1021
        %1200 = vmatprep.subr.mxu0 %v1026
        %1201 = vmatpush1.msra.mxu0 %v1025
        %1202 = vmatprep.subr.mxu0 %v1030
        %1203 = vmatpush1.msra.mxu0 %v1029
        %1204 = vmatprep.subr.mxu0 %v1034
        %1205 = vmatpush1.msra.mxu0 %v1033
        %1206 = vmatprep.subr.mxu0 %v1038
        %1207 = vmatpush1.msra.mxu0 %v1037
        %1208 = vmatprep.subr.mxu0 %v1042
        %1209 = vmatpush1.msra.mxu0 %v1041
        %1210 = vmatprep.subr.mxu0 %v1046
        %1211 = vmatpush1.msra.mxu0 %v1045
        %1212 = vmatprep.subr.mxu0 %v1050
        %1213 = vmatpush1.msra.mxu0 %v1049
        %1214 = vmatprep.subr.mxu0 %v1054
        %1215 = vmatpush1.msra.mxu0 %v1053
        %1216 = vmatprep.subr.mxu0 %v1058
        %1217 = vmatpush1.msra.mxu0 %v1057
        %1218 = vmatprep.subr.mxu0 %v1062
        %1219 = vmatpush1.msra.mxu0 %v1061
        %1220 = vmatprep.subr.mxu0 %v1066
        %1221 = vmatpush1.msra.mxu0 %v1065
        %1222 = vmatprep.subr.mxu0 %v1070
        %1223 = vmatpush1.msra.mxu0 %v1069
        %1224 = vmatprep.subr.mxu0 %v1074
        %1225 = vmatpush1.msra.mxu0 %v1073
        %1226 = vmatprep.subr.mxu0 %v1078
        %1227 = vmatpush1.msra.mxu0 %v1077
        %1228 = vmatprep.subr.mxu0 0.0
        %1229 = vmatpush1.msra.mxu0 0.0
        %1230 = vmatprep.subr.mxu0 0.0
        %1231 = vmatpush1.msra.mxu0 0.0
        %1232 = vmatprep.subr.mxu0 0.0
        %1233 = vmatpush1.msra.mxu0 0.0
        %1234 = vmatprep.subr.mxu0 0.0
        %1235 = vmatpush1.msra.mxu0 0.0
        %1236 = vmatprep.subr.mxu0 0.0
        %1237 = vmatpush1.msra.mxu0 0.0
        %1238 = vmatprep.subr.mxu0 0.0
        %1239 = vmatpush1.msra.mxu0 0.0
        %1240 = vmatprep.subr.mxu0 0.0
        %1241 = vmatpush1.msra.mxu0 0.0
        %1242 = vmatprep.subr.mxu0 0.0
        %1243 = vmatpush1.msra.mxu0 0.0
        %1244 = vmatprep.subr.mxu0 0.0
        %1245 = vmatpush1.msra.mxu0 0.0
        %1246 = vmatprep.subr.mxu0 0.0
        %1247 = vmatpush1.msra.mxu0 0.0
        %1248 = vmatprep.subr.mxu0 0.0
        %1249 = vmatpush1.msra.mxu0 0.0
        %1250 = vmatprep.subr.mxu0 0.0
        %1251 = vmatpush1.msra.mxu0 0.0
        %1252 = vmatprep.subr.mxu0 0.0
        %1253 = vmatpush1.msra.mxu0 0.0
        %1254 = vmatprep.subr.mxu0 0.0
        %1255 = vmatpush1.msra.mxu0 0.0
        %1256 = vmatprep.subr.mxu0 0.0
        %1257 = vmatpush1.msra.mxu0 0.0
        %1258 = vmatprep.subr.mxu0 0.0
        %1259 = vmatpush1.msra.mxu0 0.0
        %1260 = vmatprep.mubr.f32.mxu0 0.0
        %1261 = vmatmul.mubr.f32.gmra.mrb[0].mxu0 %v1079
        %v1262 = vpop.f32.mrb[0].mxu0
        %v1263 = vadd.f32 %v1090, %v1262
        %v1264 = vpop.f32.mrb[0].mxu0
        %v1265 = vadd.f32 %v1090, %v1264
        %1266 = vmatprep.mubr.f32.mxu0 0.0
        %1267 = vmatmul.mubr.f32.gmra.mrb[0].mxu0 %v1080
        %v1268 = vpop.f32.mrb[0].mxu0
        %v1269 = vadd.f32 %v1095, %v1268
        %v1270 = vpop.f32.mrb[0].mxu0
        %v1271 = vadd.f32 %v1095, %v1270
        %1272 = vmatprep.mubr.f32.mxu0 0.0
        %1273 = vmatmul.mubr.f32.gmra.mrb[0].mxu0 %v1081
        %v1274 = vpop.f32.mrb[0].mxu0
        %v1275 = vadd.f32 %v1100, %v1274
        %v1276 = vpop.f32.mrb[0].mxu0
        %v1277 = vadd.f32 %v1100, %v1276
        %1278 = vmatprep.mubr.f32.mxu0 0.0
        %1279 = vmatmul.mubr.f32.gmra.mrb[0].mxu0 %v1082
        %v1280 = vpop.f32.mrb[0].mxu0
        %v1281 = vadd.f32 %v1105, %v1280
        %v1282 = vpop.f32.mrb[0].mxu0
        %v1283 = vadd.f32 %v1105, %v1282
        %1284 = vdwg.mxu0
        %v1285 = vadd.f32 %v1174, %v260
        %v1286 = vadd.f32 %v1176, %v261
        %v1287 = vadd.f32 %v1263, %v262
        %v1288 = vadd.f32 %v1265, %v263
        %v1289 = vadd.f32 %v1180, %v264
        %v1290 = vadd.f32 %v1182, %v265
        %v1291 = vadd.f32 %v1269, %v266
        %v1292 = vadd.f32 %v1271, %v267
        %v1293 = vadd.f32 %v1186, %v268
        %v1294 = vadd.f32 %v1188, %v269
        %v1295 = vadd.f32 %v1275, %v270
        %v1296 = vadd.f32 %v1277, %v271
        %v1297 = vadd.f32 %v1192, %v272
        %v1298 = vadd.f32 %v1194, %v273
        %v1299 = vadd.f32 %v1281, %v274
        %v1300 = vadd.f32 %v1283, %v275
        %1301 = vst [vmem:[%s245] sm:$0xff] %v1285
        %1302 = vst [vmem:[%s245 + $0x8] sm:$0xff] %v1286
        %1303 = vst [vmem:[%s245 + $0x10] sm:$0xff] %v1287
        %1304 = vst [vmem:[%s245 + $0x18] sm:$0xff] %v1288
        %1305 = vst [vmem:[%s245 + $0x20] sm:$0xff] %v1289
        %1306 = vst [vmem:[%s245 + $0x28] sm:$0xff] %v1290
        %1307 = vst [vmem:[%s245 + $0x30] sm:$0xff] %v1291
        %1308 = vst [vmem:[%s245 + $0x38] sm:$0xff] %v1292
        %1309 = vst [vmem:[%s245 + $0x40] sm:$0xff] %v1293
        %1310 = vst [vmem:[%s245 + $0x48] sm:$0xff] %v1294
        %1311 = vst [vmem:[%s245 + $0x50] sm:$0xff] %v1295
        %1312 = vst [vmem:[%s245 + $0x58] sm:$0xff] %v1296
        %1313 = vst [vmem:[%s245 + $0x60] sm:$0xff] %v1297
        %1314 = vst [vmem:[%s245 + $0x68] sm:$0xff] %v1298
        %1315 = vst [vmem:[%s245 + $0x70] sm:$0xff] %v1299
        %1316 = vst [vmem:[%s245 + $0x78] sm:$0xff] %v1300
        %s1317 = sand.u32 %s153, 1
        %s1318 = scalar_lea.sflag [#allocation3], %s1317
        %s1319 = sand.u32 %s153, 1
        %s1320 = smul.addr %s1319, 128
        %s1321 = scalar_lea.vmem [#allocation2], %s1320
        // Predicated region
        $region41: #{tpu_custom_call.1} parent=39 // pred_check
          %p1322 = pneg %p163
        $region42: #{tpu_custom_call.1} parent=39 // pred_check_branch
          %1324 = sbr.rel (%p1322) target = $region44
        $region43: #{tpu_custom_call.1} parent=39 // pred_region
          %s1325 = smul.u32 4, %s23
          %s1326 = smul.u32 4, %s24
          %s1328 = ssub.s32 2048, 2048
          %1329 = vsyncadd %s1318, %s1328
          %s1330 = smul.addr %s1325, 4
          %s1331 = sadd.s32 %s1326, %s1330
          %s1332 = smul.addr %s1331, 128
          %s1333 = scalar_lea.hbm %s5, %s1332
          %s1334 = sshll.u32 %s1321, 4
          %s1335 = int_to_ptr.vmem [resolvable:$true] %s1334
          %1340 = dma.vmem_to_hbm [thread:$0]  %s1335, 2048, %s1333, %s1318, 512, 512, 32
        $region44: #{tpu_custom_call.1} parent=39 // pred_fallthru
          _
      $region40: #{tpu_custom_call.1} parent=5 // pred_fallthru
        _
      %p1341 = scmp.le.s32.totalorder 2, %s14
      // Predicated region
      $region45: #{tpu_custom_call.1} parent=5 // pred_check
        %p1342 = pneg %p1341
      $region46: #{tpu_custom_call.1} parent=5 // pred_check_branch
        %1344 = sbr.rel (%p1342) target = $region48
      $region47: #{tpu_custom_call.1} parent=5 // pred_region
        %s1345 = ssub.s32 %s14, 2
        // Predicated region
        $region49: #{tpu_custom_call.1} parent=47 // pred_check
          %p1346 = pneg %p169
        $region50: #{tpu_custom_call.1} parent=47 // pred_check_branch
          %1348 = sbr.rel (%p1346) target = $region52
        $region51: #{tpu_custom_call.1} parent=47 // pred_region
          %s1349 = sand.u32 %s154, 1
          %s1350 = scalar_lea.sflag [#allocation3], %s1349
          %s1351 = sand.u32 %s154, 1
          %s1352 = smul.addr %s1351, 128
          %s1353 = scalar_lea.vmem [#allocation2], %s1352
          %1354 = dma.done %s1350, 2048
        $region52: #{tpu_custom_call.1} parent=47 // pred_fallthru
          _
      $region48: #{tpu_custom_call.1} parent=5 // pred_fallthru
        _
    $region6: #{tpu_custom_call.1} parent=1 // loop_footer
      %s18 = sadd.s32 1, %s14
    $region7: #{tpu_custom_call.1} parent=1 // loop_footer_branch
      %13 = sbr.rel target = $region3
    $region8: #{tpu_custom_call.1} parent=1 // loop_exit
      _
    %1355 = vsyncpa [#allocation3], 1
    %s1356 = scalar_lea.sflag [#allocation3], 1
    %1357 = vsyncpa %s1356, 1

</llo_original>
